<compile_context>
chip_gen: v5e
topology: v5e:2x2
jax: 0.10.0
libtpu: 0.0.40
codegen_flags: <defaults>
</compile_context>

<pallas_src>
import jax
import jax.numpy as jnp
from jax import lax
from jax.experimental import pallas as pl
from jax.experimental.pallas import tpu as pltpu

HIDDEN = 128
ALIGN = 256        # batch padding / tile alignment (multiple of 8 sublanes)
TM_SOFT_MAX = 8192  # soft cap on rows per grid step


def _round_up(x, m):
    return (x + m - 1) // m * m


def _cdiv(a, b):
    return -(-a // b)


def _pick_tiling(n, e):
    """Choose (tm, grid_size, n_pad) from a per-generation VMEM budget."""
    try:
        vmem_cap = int(pltpu.get_tpu_info().vmem_capacity_bytes)
    except Exception:  # interpret mode / older runtimes
        vmem_cap = 64 * 1024 * 1024  # assume the smallest (v7x per-TC) VMEM
    # Budget for streamed buffers + intermediates; leave plenty of headroom
    # under the 48 MiB scoped limit (and under v7x's 64 MiB physical VMEM).
    budget = min(vmem_cap // 2, 32 * 1024 * 1024)

    # Resident weights (bf16 W1 halves, counted double-buffered) + biases.
    weights_bytes = 2 * (2 * e * HIDDEN * 2) + 4 * HIDDEN * 4
    # Per-row VMEM cost: x_i + x_j f32 tiles (double-buffered) + in-kernel bf16
    # copies + h in f32 and bf16 + the (1, tm) f32 output (double-buffered).
    per_row_bytes = (2 * 2 * e * 4) + (2 * e * 2) + (HIDDEN * 4) + (HIDDEN * 2) + 8

    tm_cap = max(ALIGN, (budget - weights_bytes) // per_row_bytes)
    tm_cap = max(ALIGN, (tm_cap // ALIGN) * ALIGN)
    tm_cap = min(tm_cap, TM_SOFT_MAX)

    n_align = _round_up(max(n, 1), ALIGN)
    # >= 2 grid steps when possible so v7x's two TensorCores both get work
    # (harmless on single-TC v5e/v6e).
    min_steps = 2 if n_align >= 2 * ALIGN else 1
    g = max(min_steps, _cdiv(n_align, tm_cap))
    tm = _round_up(_cdiv(n_align, g), ALIGN)
    n_pad = g * tm  # padding waste is at most ~ALIGN rows per grid step
    return tm, g, n_pad


def _link_predictor_kernel(xi_ref, xj_ref, w1a_ref, w1b_ref, b1_ref,
                           w2_ref, b2_ref, out_ref):
    # Cast activations to bf16 on the VPU (inputs are streamed in f32, the
    # native MXU operand dtype is bf16); accumulate in f32.
    xi = xi_ref[...].astype(jnp.bfloat16)                         # (TM, E)
    xj = xj_ref[...].astype(jnp.bfloat16)                         # (TM, E)
    h = jnp.dot(xi, w1a_ref[...], preferred_element_type=jnp.float32)
    h = h + jnp.dot(xj, w1b_ref[...], preferred_element_type=jnp.float32)
    h = jnp.maximum(h + b1_ref[...], 0.0)                         # (TM, 128) f32
    h_bf = h.astype(jnp.bfloat16)                                 # halves vreg/VMEM footprint
    # Second linear: contract the hidden dim of BOTH operands so the result is
    # produced lane-major as (1, TM) directly (unmasked lane-dense stores).
    out = lax.dot_general(
        w2_ref[...], h_bf, (((1,), (1,)), ((), ())),
        preferred_element_type=jnp.float32) + b2_ref[...]         # (1, TM)
    out_ref[...] = out.astype(out_ref.dtype)


def link_predictor_forward(x_i, x_j, params):
    """Fused forward pass. x_i, x_j: [N, E] float32. Returns [N] float32."""
    w1, b1, w2, b2 = params["w1"], params["b1"], params["w2"], params["b2"]
    n, e = x_i.shape
    assert x_j.shape == (n, e)
    assert w1.shape == (2 * e, HIDDEN)

    tm, g, n_pad = _pick_tiling(n, e)
    if n_pad != n:
        pad = ((0, n_pad - n), (0, 0))
        x_i = jnp.pad(x_i, pad)
        x_j = jnp.pad(x_j, pad)
    x_i = x_i.astype(jnp.float32)
    x_j = x_j.astype(jnp.float32)

    # Split W1 so the concat never has to be materialized; weights stay
    # VMEM-resident across grid steps (constant index maps).
    w1a = w1[:e].astype(jnp.bfloat16)                     # [E, 128]
    w1b = w1[e:].astype(jnp.bfloat16)                     # [E, 128]
    b1_2d = b1.reshape(1, HIDDEN).astype(jnp.float32)     # [1, 128]
    w2_row = w2.reshape(1, HIDDEN).astype(jnp.bfloat16)   # [1, 128] (== w2.T)
    b2_2d = b2.reshape(1, 1).astype(jnp.float32)          # [1, 1]

    out = pl.pallas_call(
        _link_predictor_kernel,
        out_shape=jax.ShapeDtypeStruct((1, n_pad), jnp.float32),
        grid=(g,),
        in_specs=[
            pl.BlockSpec((tm, e), lambda i: (i, 0)),          # x_i tile (streamed)
            pl.BlockSpec((tm, e), lambda i: (i, 0)),          # x_j tile (streamed)
            pl.BlockSpec((e, HIDDEN), lambda i: (0, 0)),      # W1[:E]  (resident)
            pl.BlockSpec((e, HIDDEN), lambda i: (0, 0)),      # W1[E:]  (resident)
            pl.BlockSpec((1, HIDDEN), lambda i: (0, 0)),      # b1      (resident)
            pl.BlockSpec((1, HIDDEN), lambda i: (0, 0)),      # W2 row  (resident)
            pl.BlockSpec((1, 1), lambda i: (0, 0)),           # b2      (resident)
        ],
        out_specs=pl.BlockSpec((1, tm), lambda i: (0, i)),    # lane-dense output
        compiler_params=pltpu.CompilerParams(
            dimension_semantics=("parallel",),
            vmem_limit_bytes=48 * 1024 * 1024,
        ),
    )(x_i, x_j, w1a, w1b, b1_2d, w2_row, b2_2d)

    # torch .squeeze() on [N, 1] -> [N]
    return out.reshape(n_pad)[:n]


def init_params(embed_dim, key):
    """Deterministic init matching the nn.Linear shapes (Kaiming-uniform-ish)."""
    k1, k2, k3, k4 = jax.random.split(key, 4)
    in1 = embed_dim * 2
    lim1 = 1.0 / jnp.sqrt(in1)
    lim2 = 1.0 / jnp.sqrt(HIDDEN)
    # Stored as [in_features, out_features] (i.e. transposed vs torch's weight).
    w1 = jax.random.uniform(k1, (in1, HIDDEN), jnp.float32, -lim1, lim1)
    b1 = jax.random.uniform(k2, (HIDDEN,), jnp.float32, -lim1, lim1)
    w2 = jax.random.uniform(k3, (HIDDEN, 1), jnp.float32, -lim2, lim2)
    b2 = jax.random.uniform(k4, (1,), jnp.float32, -lim2, lim2)
    return {"w1": w1, "b1": b1, "w2": w2, "b2": b2}


def reference_forward(x_i, x_j, params):
    """Pure-f32 PyTorch-equivalent reference."""
    z = jnp.concatenate([x_i, x_j], axis=1)
    h = jnp.maximum(z @ params["w1"] + params["b1"], 0.0)
    return (h @ params["w2"] + params["b2"])[:, 0]


def reference_forward_matched(x_i, x_j, params):
    """Reference that mirrors the kernel's bf16-operand / f32-accumulate math."""
    e = x_i.shape[1]
    w1a = params["w1"][:e].astype(jnp.bfloat16)
    w1b = params["w1"][e:].astype(jnp.bfloat16)
    h = (jnp.dot(x_i.astype(jnp.bfloat16), w1a, preferred_element_type=jnp.float32)
         + jnp.dot(x_j.astype(jnp.bfloat16), w1b, preferred_element_type=jnp.float32))
    h = jnp.maximum(h + params["b1"], 0.0).astype(jnp.bfloat16)
    w2_row = params["w2"].reshape(1, HIDDEN).astype(jnp.bfloat16)
    out = lax.dot_general(w2_row, h, (((1,), (1,)), ((), ())),
                          preferred_element_type=jnp.float32) + params["b2"].reshape(1, 1)
    return out[0]


if __name__ == "__main__":
    key = jax.random.PRNGKey(0)
    k_xi, k_xj, k_p = jax.random.split(key, 3)

    N = 8           # number of candidate links (batch)
    EMBED_DIM = 32  # node embedding dim

    x_i = jax.random.normal(k_xi, (N, EMBED_DIM), jnp.float32)
    x_j = jax.random.normal(k_xj, (N, EMBED_DIM), jnp.float32)
    params = init_params(EMBED_DIM, k_p)

    out = link_predictor_forward(x_i, x_j, params)
    out = jax.block_until_ready(out)
    assert out.shape == (N,)

    # Tight check against a reference that uses the kernel's exact bf16 recipe.
    ref_matched = reference_forward_matched(x_i, x_j, params)
    assert jnp.allclose(out, ref_matched, atol=1e-3, rtol=1e-3), (out, ref_matched)

    # Loose check against the pure-f32 PyTorch-equivalent reference (bf16 MXU
    # operands introduce ~1e-2 relative error, expected & accepted).
    ref_f32 = reference_forward(x_i, x_j, params)
    assert jnp.allclose(out, ref_f32, atol=5e-2, rtol=5e-2), (out, ref_f32)

    print("KERNEL_OK")
</pallas_src>

<mosaic_0001>
module attributes {stable_mosaic.version = 11 : i64} {
  func.func @_link_predictor_kernel(%arg0: i32, %arg1: memref<256x32xf32, #tpu.memory_space<vmem>>, %arg2: memref<256x32xf32, #tpu.memory_space<vmem>>, %arg3: memref<32x128xbf16, #tpu.memory_space<vmem>>, %arg4: memref<32x128xbf16, #tpu.memory_space<vmem>>, %arg5: memref<1x128xf32, #tpu.memory_space<vmem>>, %arg6: memref<1x128xbf16, #tpu.memory_space<vmem>>, %arg7: memref<1x1xf32, #tpu.memory_space<vmem>>, %arg8: memref<1x256xf32, #tpu.memory_space<vmem>>) attributes {dimension_semantics = [#tpu.dimension_semantics<parallel>], iteration_bounds = array<i64: 1>, scalar_prefetch = 0 : i64, scratch_operands = 0 : i64, tpu.core_type = #tpu.core_type<tc>, window_params = [{transform_indices = @transform_0, window_bounds = array<i64: 256, 32>}, {transform_indices = @transform_1, window_bounds = array<i64: 256, 32>}, {pipeline_mode = #tpu.pipeline_mode<synchronous>, transform_indices = @transform_2, window_bounds = array<i64: 32, 128>}, {pipeline_mode = #tpu.pipeline_mode<synchronous>, transform_indices = @transform_3, window_bounds = array<i64: 32, 128>}, {pipeline_mode = #tpu.pipeline_mode<synchronous>, transform_indices = @transform_4, window_bounds = array<i64: 1, 128>}, {pipeline_mode = #tpu.pipeline_mode<synchronous>, transform_indices = @transform_5, window_bounds = array<i64: 1, 128>}, {pipeline_mode = #tpu.pipeline_mode<synchronous>, transform_indices = @transform_6, window_bounds = array<i64: 1, 1>}, {transform_indices = @transform_7, window_bounds = array<i64: 1, 256>}]} {
    %c0 = arith.constant 0 : index
    %c0_0 = arith.constant 0 : index
    %0 = vector.load %arg1[%c0, %c0_0] : memref<256x32xf32, #tpu.memory_space<vmem>>, vector<256x32xf32>
    %1 = arith.truncf %0 : vector<256x32xf32> to vector<256x32xbf16>
    %c0_1 = arith.constant 0 : index
    %c0_2 = arith.constant 0 : index
    %2 = vector.load %arg2[%c0_1, %c0_2] : memref<256x32xf32, #tpu.memory_space<vmem>>, vector<256x32xf32>
    %3 = arith.truncf %2 : vector<256x32xf32> to vector<256x32xbf16>
    %c0_3 = arith.constant 0 : index
    %c0_4 = arith.constant 0 : index
    %4 = vector.load %arg3[%c0_3, %c0_4] : memref<32x128xbf16, #tpu.memory_space<vmem>>, vector<32x128xbf16>
    %cst = arith.constant dense<0.000000e+00> : vector<256x128xf32>
    %5 = tpu.matmul %1, %4, %cst {dimension_numbers = #tpu.dot_dimension_numbers<[1], [0], [0], [1], [0, 0, 1, 1], [], []>} : vector<256x32xbf16>, vector<32x128xbf16>, vector<256x128xf32> -> vector<256x128xf32>
    %c0_5 = arith.constant 0 : index
    %c0_6 = arith.constant 0 : index
    %6 = vector.load %arg4[%c0_5, %c0_6] : memref<32x128xbf16, #tpu.memory_space<vmem>>, vector<32x128xbf16>
    %cst_7 = arith.constant dense<0.000000e+00> : vector<256x128xf32>
    %7 = tpu.matmul %3, %6, %cst_7 {dimension_numbers = #tpu.dot_dimension_numbers<[1], [0], [0], [1], [0, 0, 1, 1], [], []>} : vector<256x32xbf16>, vector<32x128xbf16>, vector<256x128xf32> -> vector<256x128xf32>
    %8 = arith.addf %5, %7 : vector<256x128xf32>
    %c0_8 = arith.constant 0 : index
    %c0_9 = arith.constant 0 : index
    %9 = vector.load %arg5[%c0_8, %c0_9] : memref<1x128xf32, #tpu.memory_space<vmem>>, vector<1x128xf32>
    %10 = vector.broadcast %9 : vector<1x128xf32> to vector<256x128xf32>
    %11 = arith.addf %8, %10 : vector<256x128xf32>
    %cst_10 = arith.constant 0.000000e+00 : f32
    %12 = vector.broadcast %cst_10 : f32 to vector<256x128xf32>
    %13 = arith.maximumf %11, %12 : vector<256x128xf32>
    %14 = arith.truncf %13 : vector<256x128xf32> to vector<256x128xbf16>
    %c0_11 = arith.constant 0 : index
    %c0_12 = arith.constant 0 : index
    %15 = vector.load %arg6[%c0_11, %c0_12] : memref<1x128xbf16, #tpu.memory_space<vmem>>, vector<1x128xbf16>
    %cst_13 = arith.constant dense<0.000000e+00> : vector<1x256xf32>
    %16 = tpu.matmul %15, %14, %cst_13 {dimension_numbers = #tpu.dot_dimension_numbers<[1], [1], [0], [0], [0, 0, 1, 0], [], []>} : vector<1x128xbf16>, vector<256x128xbf16>, vector<1x256xf32> -> vector<1x256xf32>
    %c0_14 = arith.constant 0 : index
    %c0_15 = arith.constant 0 : index
    %17 = vector.load %arg7[%c0_14, %c0_15] : memref<1x1xf32, #tpu.memory_space<vmem>>, vector<1x1xf32>
    %18 = vector.broadcast %17 : vector<1x1xf32> to vector<1x256xf32>
    %19 = arith.addf %16, %18 : vector<1x256xf32>
    %c0_16 = arith.constant 0 : index
    %c0_17 = arith.constant 0 : index
    %20 = vector.load %arg8[%c0_16, %c0_17] : memref<1x256xf32, #tpu.memory_space<vmem>>, vector<1x256xf32>
    tpu.vector_store %arg8[%c0_16, %c0_17], %19 {strides = array<i32>} : memref<1x256xf32, #tpu.memory_space<vmem>>, vector<1x256xf32>,
    return
  }
  func.func @transform_0(%arg0: i32) -> (i32, i32) {
    %c0_i32 = arith.constant 0 : i32
    %c0_i32_0 = arith.constant 0 : i32
    return %arg0, %c0_i32 : i32, i32
  }
  func.func @transform_1(%arg0: i32) -> (i32, i32) {
    %c0_i32 = arith.constant 0 : i32
    %c0_i32_0 = arith.constant 0 : i32
    return %arg0, %c0_i32 : i32, i32
  }
  func.func @transform_2(%arg0: i32) -> (i32, i32) {
    %c0_i32 = arith.constant 0 : i32
    %c0_i32_0 = arith.constant 0 : i32
    %c0_i32_1 = arith.constant 0 : i32
    return %c0_i32, %c0_i32_0 : i32, i32
  }
  func.func @transform_3(%arg0: i32) -> (i32, i32) {
    %c0_i32 = arith.constant 0 : i32
    %c0_i32_0 = arith.constant 0 : i32
    %c0_i32_1 = arith.constant 0 : i32
    return %c0_i32, %c0_i32_0 : i32, i32
  }
  func.func @transform_4(%arg0: i32) -> (i32, i32) {
    %c0_i32 = arith.constant 0 : i32
    %c0_i32_0 = arith.constant 0 : i32
    %c0_i32_1 = arith.constant 0 : i32
    return %c0_i32, %c0_i32_0 : i32, i32
  }
  func.func @transform_5(%arg0: i32) -> (i32, i32) {
    %c0_i32 = arith.constant 0 : i32
    %c0_i32_0 = arith.constant 0 : i32
    %c0_i32_1 = arith.constant 0 : i32
    return %c0_i32, %c0_i32_0 : i32, i32
  }
  func.func @transform_6(%arg0: i32) -> (i32, i32) {
    %c0_i32 = arith.constant 0 : i32
    %c0_i32_0 = arith.constant 0 : i32
    %c0_i32_1 = arith.constant 0 : i32
    return %c0_i32, %c0_i32_0 : i32, i32
  }
  func.func @transform_7(%arg0: i32) -> (i32, i32) {
    %c0_i32 = arith.constant 0 : i32
    %c0_i32_0 = arith.constant 0 : i32
    return %c0_i32, %arg0 : i32, i32
  }
}

</mosaic_0001>

<llo_original>
// kernel: tpu_custom_call.1
$region0: #{tpu_custom_call.1}
  #allocation0 [shape = 'u32[]', space=smem, size = 0x4, offset = 0x4, fixed_abs, tag = 'smem constant byte address 0x4 - core index']
  #allocation1 [shape = 'u32[72,128]{1,0:T(1,128)}', space=vmem, size = 0x9000, scoped, tag = 'internal scratch']
  #allocation2 [shape = 'f32[1,1]{1,0:T(1,128)S(1)}', space=vmem, size = 0x200, scoped, tag = 'scoped memory for tpu_custom_call.1']
  %s0 = inlined_call_operand.vmem [shape: f32[256,32], index: 0, kind: input, shape index: {}]
  %s1 = inlined_call_operand.vmem [shape: f32[256,32], index: 1, kind: input, shape index: {}]
  %s2 = inlined_call_operand.vmem [shape: bf16[32,128], index: 2, kind: input, shape index: {}]
  %s3 = inlined_call_operand.vmem [shape: bf16[32,128], index: 3, kind: input, shape index: {}]
  %s4 = inlined_call_operand.vmem [shape: f32[1,128], index: 4, kind: input, shape index: {}]
  %s5 = inlined_call_operand.vmem [shape: bf16[1,128], index: 5, kind: input, shape index: {}]
  %s6 = inlined_call_operand.<no memory space> [shape: f32[1,1], index: 6, kind: input, shape index: {}]
  %s7 = inlined_call_operand.hbm [shape: f32[1,256], index: 7, kind: output, shape index: {}]
  %s8 = sld [smem:[#allocation0]]
  $region38: #{tpu_custom_call.1} parent=0
    _
  %s10 = ssub.s32 1, %s8
  %s11 = scalar_select 0, %s10, %s8
  %v12 = vstv %s6
  %13 = vst [vmem:[#allocation2] sm:$0x1] %v12
  $region1: #{tpu_custom_call.1} parent=0
    #allocation3 [shape = 'u8[1024]{0}', space=vmem, size = 0x400, scoped, tag = 'output window, operand 0, single buffered']
    #allocation4 [shape = 's32[1]{0}', space=sflag, size = 0x4, scoped, tag = 'scoped memory for tpu_custom_call.1']
    %14 = vsyncpa [#allocation4], 0
    // Predicated region
    $region2: #{tpu_custom_call.1} parent=1 // pred_check
      _
    $region3: #{tpu_custom_call.1} parent=1 // pred_check_branch
      %16 = sbr.rel (0) target = $region5
    $region4: #{tpu_custom_call.1} parent=1 // pred_region
      _
    $region5: #{tpu_custom_call.1} parent=1 // pred_fallthru
      _
    // Predicated region
    $region6: #{tpu_custom_call.1} parent=1 // pred_check
      _
    $region7: #{tpu_custom_call.1} parent=1 // pred_check_branch
      %18 = sbr.rel (0) target = $region9
    $region8: #{tpu_custom_call.1} parent=1 // pred_region
      _
    $region9: #{tpu_custom_call.1} parent=1 // pred_fallthru
      _
    // Predicated region
    $region10: #{tpu_custom_call.1} parent=1 // pred_check
      _
    $region11: #{tpu_custom_call.1} parent=1 // pred_check_branch
      %20 = sbr.rel (0) target = $region13
    $region12: #{tpu_custom_call.1} parent=1 // pred_region
      _
    $region13: #{tpu_custom_call.1} parent=1 // pred_fallthru
      _
    // Predicated region
    $region14: #{tpu_custom_call.1} parent=1 // pred_check
      _
    $region15: #{tpu_custom_call.1} parent=1 // pred_check_branch
      %22 = sbr.rel (0) target = $region17
    $region16: #{tpu_custom_call.1} parent=1 // pred_region
      _
    $region17: #{tpu_custom_call.1} parent=1 // pred_fallthru
      _
    // Predicated region
    $region18: #{tpu_custom_call.1} parent=1 // pred_check
      _
    $region19: #{tpu_custom_call.1} parent=1 // pred_check_branch
      %24 = sbr.rel (0) target = $region21
    $region20: #{tpu_custom_call.1} parent=1 // pred_region
      _
    $region21: #{tpu_custom_call.1} parent=1 // pred_fallthru
      _
    // Predicated region
    $region22: #{tpu_custom_call.1} parent=1 // pred_check
      _
    $region23: #{tpu_custom_call.1} parent=1 // pred_check_branch
      %26 = sbr.rel (0) target = $region25
    $region24: #{tpu_custom_call.1} parent=1 // pred_region
      _
    $region25: #{tpu_custom_call.1} parent=1 // pred_fallthru
      _
    // Predicated region
    $region26: #{tpu_custom_call.1} parent=1 // pred_check
      _
    $region27: #{tpu_custom_call.1} parent=1 // pred_check_branch
      %28 = sbr.rel (0) target = $region29
    $region28: #{tpu_custom_call.1} parent=1 // pred_region
      _
    $region29: #{tpu_custom_call.1} parent=1 // pred_fallthru
      _
    %v30 = vld [vmem:[%s0] sm:$0xff]
    %v31 = vld [vmem:[%s0 + $0x8] sm:$0xff]
    %v32 = vld [vmem:[%s0 + $0x10] sm:$0xff]
    %v33 = vld [vmem:[%s0 + $0x18] sm:$0xff]
    %v34 = vld [vmem:[%s0 + $0x20] sm:$0xff]
    %v35 = vld [vmem:[%s0 + $0x28] sm:$0xff]
    %v36 = vld [vmem:[%s0 + $0x30] sm:$0xff]
    %v37 = vld [vmem:[%s0 + $0x38] sm:$0xff]
    %v38 = vld [vmem:[%s0 + $0x40] sm:$0xff]
    %v39 = vld [vmem:[%s0 + $0x48] sm:$0xff]
    %v40 = vld [vmem:[%s0 + $0x50] sm:$0xff]
    %v41 = vld [vmem:[%s0 + $0x58] sm:$0xff]
    %v42 = vld [vmem:[%s0 + $0x60] sm:$0xff]
    %v43 = vld [vmem:[%s0 + $0x68] sm:$0xff]
    %v44 = vld [vmem:[%s0 + $0x70] sm:$0xff]
    %v45 = vld [vmem:[%s0 + $0x78] sm:$0xff]
    %v46 = vld [vmem:[%s0 + $0x80] sm:$0xff]
    %v47 = vld [vmem:[%s0 + $0x88] sm:$0xff]
    %v48 = vld [vmem:[%s0 + $0x90] sm:$0xff]
    %v49 = vld [vmem:[%s0 + $0x98] sm:$0xff]
    %v50 = vld [vmem:[%s0 + $0xa0] sm:$0xff]
    %v51 = vld [vmem:[%s0 + $0xa8] sm:$0xff]
    %v52 = vld [vmem:[%s0 + $0xb0] sm:$0xff]
    %v53 = vld [vmem:[%s0 + $0xb8] sm:$0xff]
    %v54 = vld [vmem:[%s0 + $0xc0] sm:$0xff]
    %v55 = vld [vmem:[%s0 + $0xc8] sm:$0xff]
    %v56 = vld [vmem:[%s0 + $0xd0] sm:$0xff]
    %v57 = vld [vmem:[%s0 + $0xd8] sm:$0xff]
    %v58 = vld [vmem:[%s0 + $0xe0] sm:$0xff]
    %v59 = vld [vmem:[%s0 + $0xe8] sm:$0xff]
    %v60 = vld [vmem:[%s0 + $0xf0] sm:$0xff]
    %v61 = vld [vmem:[%s0 + $0xf8] sm:$0xff]
    %v62 = vpack.c.bf16 %v31, %v30
    %v63 = vpack.c.bf16 %v33, %v32
    %v64 = vpack.c.bf16 %v35, %v34
    %v65 = vpack.c.bf16 %v37, %v36
    %v66 = vpack.c.bf16 %v39, %v38
    %v67 = vpack.c.bf16 %v41, %v40
    %v68 = vpack.c.bf16 %v43, %v42
    %v69 = vpack.c.bf16 %v45, %v44
    %v70 = vpack.c.bf16 %v47, %v46
    %v71 = vpack.c.bf16 %v49, %v48
    %v72 = vpack.c.bf16 %v51, %v50
    %v73 = vpack.c.bf16 %v53, %v52
    %v74 = vpack.c.bf16 %v55, %v54
    %v75 = vpack.c.bf16 %v57, %v56
    %v76 = vpack.c.bf16 %v59, %v58
    %v77 = vpack.c.bf16 %v61, %v60
    %v78 = vld [vmem:[%s1] sm:$0xff]
    %v79 = vld [vmem:[%s1 + $0x8] sm:$0xff]
    %v80 = vld [vmem:[%s1 + $0x10] sm:$0xff]
    %v81 = vld [vmem:[%s1 + $0x18] sm:$0xff]
    %v82 = vld [vmem:[%s1 + $0x20] sm:$0xff]
    %v83 = vld [vmem:[%s1 + $0x28] sm:$0xff]
    %v84 = vld [vmem:[%s1 + $0x30] sm:$0xff]
    %v85 = vld [vmem:[%s1 + $0x38] sm:$0xff]
    %v86 = vld [vmem:[%s1 + $0x40] sm:$0xff]
    %v87 = vld [vmem:[%s1 + $0x48] sm:$0xff]
    %v88 = vld [vmem:[%s1 + $0x50] sm:$0xff]
    %v89 = vld [vmem:[%s1 + $0x58] sm:$0xff]
    %v90 = vld [vmem:[%s1 + $0x60] sm:$0xff]
    %v91 = vld [vmem:[%s1 + $0x68] sm:$0xff]
    %v92 = vld [vmem:[%s1 + $0x70] sm:$0xff]
    %v93 = vld [vmem:[%s1 + $0x78] sm:$0xff]
    %v94 = vld [vmem:[%s1 + $0x80] sm:$0xff]
    %v95 = vld [vmem:[%s1 + $0x88] sm:$0xff]
    %v96 = vld [vmem:[%s1 + $0x90] sm:$0xff]
    %v97 = vld [vmem:[%s1 + $0x98] sm:$0xff]
    %v98 = vld [vmem:[%s1 + $0xa0] sm:$0xff]
    %v99 = vld [vmem:[%s1 + $0xa8] sm:$0xff]
    %v100 = vld [vmem:[%s1 + $0xb0] sm:$0xff]
    %v101 = vld [vmem:[%s1 + $0xb8] sm:$0xff]
    %v102 = vld [vmem:[%s1 + $0xc0] sm:$0xff]
    %v103 = vld [vmem:[%s1 + $0xc8] sm:$0xff]
    %v104 = vld [vmem:[%s1 + $0xd0] sm:$0xff]
    %v105 = vld [vmem:[%s1 + $0xd8] sm:$0xff]
    %v106 = vld [vmem:[%s1 + $0xe0] sm:$0xff]
    %v107 = vld [vmem:[%s1 + $0xe8] sm:$0xff]
    %v108 = vld [vmem:[%s1 + $0xf0] sm:$0xff]
    %v109 = vld [vmem:[%s1 + $0xf8] sm:$0xff]
    %v110 = vpack.c.bf16 %v79, %v78
    %v111 = vpack.c.bf16 %v81, %v80
    %v112 = vpack.c.bf16 %v83, %v82
    %v113 = vpack.c.bf16 %v85, %v84
    %v114 = vpack.c.bf16 %v87, %v86
    %v115 = vpack.c.bf16 %v89, %v88
    %v116 = vpack.c.bf16 %v91, %v90
    %v117 = vpack.c.bf16 %v93, %v92
    %v118 = vpack.c.bf16 %v95, %v94
    %v119 = vpack.c.bf16 %v97, %v96
    %v120 = vpack.c.bf16 %v99, %v98
    %v121 = vpack.c.bf16 %v101, %v100
    %v122 = vpack.c.bf16 %v103, %v102
    %v123 = vpack.c.bf16 %v105, %v104
    %v124 = vpack.c.bf16 %v107, %v106
    %v125 = vpack.c.bf16 %v109, %v108
    %v126 = vld [vmem:[%s2] sm:$0xf]
    %v127 = vld [vmem:[%s2 + $0x4] sm:$0xf]
    %v128 = vld [vmem:[%s2 + $0x8] sm:$0xf]
    %v129 = vld [vmem:[%s2 + $0xc] sm:$0xf]
    %v130 = vld [vmem:[%s3] sm:$0xf]
    %v131 = vld [vmem:[%s3 + $0x4] sm:$0xf]
    %v132 = vld [vmem:[%s3 + $0x8] sm:$0xf]
    %v133 = vld [vmem:[%s3 + $0xc] sm:$0xf]
    %v138 = vunpack.c.l.b16 %v130
    %v139 = vunpack.c.l.b16 %v131
    %v140 = vunpack.c.l.b16 %v132
    %v141 = vunpack.c.l.b16 %v133
    %v142 = vpack.c.b16 %v139, %v138
    %v143 = vpack.c.b16 %v141, %v140
    %vm146 = vcmask 261120
    %v148 = vsel %vm146, %v110, 0
    %v151 = vsel %vm146, %v111, 0
    %v154 = vsel %vm146, %v112, 0
    %v157 = vsel %vm146, %v113, 0
    %v160 = vsel %vm146, %v114, 0
    %v163 = vsel %vm146, %v115, 0
    %v166 = vsel %vm146, %v116, 0
    %v169 = vsel %vm146, %v117, 0
    %v172 = vsel %vm146, %v118, 0
    %v175 = vsel %vm146, %v119, 0
    %v178 = vsel %vm146, %v120, 0
    %v181 = vsel %vm146, %v121, 0
    %v184 = vsel %vm146, %v122, 0
    %v187 = vsel %vm146, %v123, 0
    %v190 = vsel %vm146, %v124, 0
    %v193 = vsel %vm146, %v125, 0
    %195 = vmatpush.bf16.msra.mxu0 0
    %196 = vmatpush.bf16.msra.mxu0 0
    %197 = vmatpush.bf16.msra.mxu0 0
    %198 = vmatpush.bf16.msra.mxu0 0
    %199 = vmatpush.bf16.msra.mxu0 0
    %200 = vmatpush.bf16.msra.mxu0 0
    %201 = vmatpush.bf16.msra.mxu0 %v143
    %202 = vmatpush.bf16.msra.mxu0 %v142
    %203 = vmatmul.bf16.gmra.mxu0 %v148
    %v204 = vpop.f32.mrf.mxu0
    %v205 = vadd.f32 0.0, %v204
    %v206 = vpop.f32.mrf.mxu0
    %v207 = vadd.f32 0.0, %v206
    %208 = vmatmul.bf16.gmra.mxu0 %v151
    %v209 = vpop.f32.mrf.mxu0
    %v210 = vadd.f32 0.0, %v209
    %v211 = vpop.f32.mrf.mxu0
    %v212 = vadd.f32 0.0, %v211
    %213 = vmatmul.bf16.gmra.mxu0 %v154
    %v214 = vpop.f32.mrf.mxu0
    %v215 = vadd.f32 0.0, %v214
    %v216 = vpop.f32.mrf.mxu0
    %v217 = vadd.f32 0.0, %v216
    %218 = vmatmul.bf16.gmra.mxu0 %v157
    %v219 = vpop.f32.mrf.mxu0
    %v220 = vadd.f32 0.0, %v219
    %v221 = vpop.f32.mrf.mxu0
    %v222 = vadd.f32 0.0, %v221
    %223 = vmatmul.bf16.gmra.mxu0 %v160
    %v224 = vpop.f32.mrf.mxu0
    %v225 = vadd.f32 0.0, %v224
    %v226 = vpop.f32.mrf.mxu0
    %v227 = vadd.f32 0.0, %v226
    %228 = vmatmul.bf16.gmra.mxu0 %v163
    %v229 = vpop.f32.mrf.mxu0
    %v230 = vadd.f32 0.0, %v229
    %v231 = vpop.f32.mrf.mxu0
    %v232 = vadd.f32 0.0, %v231
    %233 = vmatmul.bf16.gmra.mxu0 %v166
    %v234 = vpop.f32.mrf.mxu0
    %v235 = vadd.f32 0.0, %v234
    %v236 = vpop.f32.mrf.mxu0
    %v237 = vadd.f32 0.0, %v236
    %238 = vmatmul.bf16.gmra.mxu0 %v169
    %v239 = vpop.f32.mrf.mxu0
    %v240 = vadd.f32 0.0, %v239
    %v241 = vpop.f32.mrf.mxu0
    %v242 = vadd.f32 0.0, %v241
    %243 = vmatmul.bf16.gmra.mxu0 %v172
    %v244 = vpop.f32.mrf.mxu0
    %v245 = vadd.f32 0.0, %v244
    %v246 = vpop.f32.mrf.mxu0
    %v247 = vadd.f32 0.0, %v246
    %248 = vmatmul.bf16.gmra.mxu0 %v175
    %v249 = vpop.f32.mrf.mxu0
    %v250 = vadd.f32 0.0, %v249
    %v251 = vpop.f32.mrf.mxu0
    %v252 = vadd.f32 0.0, %v251
    %253 = vmatmul.bf16.gmra.mxu0 %v178
    %v254 = vpop.f32.mrf.mxu0
    %v255 = vadd.f32 0.0, %v254
    %v256 = vpop.f32.mrf.mxu0
    %v257 = vadd.f32 0.0, %v256
    %258 = vmatmul.bf16.gmra.mxu0 %v181
    %v259 = vpop.f32.mrf.mxu0
    %v260 = vadd.f32 0.0, %v259
    %v261 = vpop.f32.mrf.mxu0
    %v262 = vadd.f32 0.0, %v261
    %263 = vmatmul.bf16.gmra.mxu0 %v184
    %v264 = vpop.f32.mrf.mxu0
    %v265 = vadd.f32 0.0, %v264
    %v266 = vpop.f32.mrf.mxu0
    %v267 = vadd.f32 0.0, %v266
    %268 = vmatmul.bf16.gmra.mxu0 %v187
    %v269 = vpop.f32.mrf.mxu0
    %v270 = vadd.f32 0.0, %v269
    %v271 = vpop.f32.mrf.mxu0
    %v272 = vadd.f32 0.0, %v271
    %273 = vmatmul.bf16.gmra.mxu0 %v190
    %v274 = vpop.f32.mrf.mxu0
    %v275 = vadd.f32 0.0, %v274
    %v276 = vpop.f32.mrf.mxu0
    %v277 = vadd.f32 0.0, %v276
    %278 = vmatmul.bf16.gmra.mxu0 %v193
    %v279 = vpop.f32.mrf.mxu0
    %v280 = vadd.f32 0.0, %v279
    %v281 = vpop.f32.mrf.mxu0
    %v282 = vadd.f32 0.0, %v281
    %283 = vdwg.mxu0
    %v288 = vunpack.c.l.b16 %v126
    %v289 = vunpack.c.l.b16 %v127
    %v290 = vunpack.c.l.b16 %v128
    %v291 = vunpack.c.l.b16 %v129
    %v292 = vpack.c.b16 %v289, %v288
    %v293 = vpack.c.b16 %v291, %v290
    %v297 = vsel %vm146, %v62, 0
    %v300 = vsel %vm146, %v63, 0
    %v303 = vsel %vm146, %v64, 0
    %v306 = vsel %vm146, %v65, 0
    %v309 = vsel %vm146, %v66, 0
    %v312 = vsel %vm146, %v67, 0
    %v315 = vsel %vm146, %v68, 0
    %v318 = vsel %vm146, %v69, 0
    %v321 = vsel %vm146, %v70, 0
    %v324 = vsel %vm146, %v71, 0
    %v327 = vsel %vm146, %v72, 0
    %v330 = vsel %vm146, %v73, 0
    %v333 = vsel %vm146, %v74, 0
    %v336 = vsel %vm146, %v75, 0
    %v339 = vsel %vm146, %v76, 0
    %v342 = vsel %vm146, %v77, 0
    %344 = vmatpush.bf16.msra.mxu0 0
    %345 = vmatpush.bf16.msra.mxu0 0
    %346 = vmatpush.bf16.msra.mxu0 0
    %347 = vmatpush.bf16.msra.mxu0 0
    %348 = vmatpush.bf16.msra.mxu0 0
    %349 = vmatpush.bf16.msra.mxu0 0
    %350 = vmatpush.bf16.msra.mxu0 %v293
    %351 = vmatpush.bf16.msra.mxu0 %v292
    %352 = vmatmul.bf16.gmra.mxu0 %v297
    %v353 = vpop.f32.mrf.mxu0
    %v354 = vadd.f32 %v205, %v353
    %v355 = vpop.f32.mrf.mxu0
    %v356 = vadd.f32 %v207, %v355
    %357 = vmatmul.bf16.gmra.mxu0 %v300
    %v358 = vpop.f32.mrf.mxu0
    %v359 = vadd.f32 %v210, %v358
    %v360 = vpop.f32.mrf.mxu0
    %v361 = vadd.f32 %v212, %v360
    %362 = vmatmul.bf16.gmra.mxu0 %v303
    %v363 = vpop.f32.mrf.mxu0
    %v364 = vadd.f32 %v215, %v363
    %v365 = vpop.f32.mrf.mxu0
    %v366 = vadd.f32 %v217, %v365
    %367 = vmatmul.bf16.gmra.mxu0 %v306
    %v368 = vpop.f32.mrf.mxu0
    %v369 = vadd.f32 %v220, %v368
    %v370 = vpop.f32.mrf.mxu0
    %v371 = vadd.f32 %v222, %v370
    %372 = vmatmul.bf16.gmra.mxu0 %v309
    %v373 = vpop.f32.mrf.mxu0
    %v374 = vadd.f32 %v225, %v373
    %v375 = vpop.f32.mrf.mxu0
    %v376 = vadd.f32 %v227, %v375
    %377 = vmatmul.bf16.gmra.mxu0 %v312
    %v378 = vpop.f32.mrf.mxu0
    %v379 = vadd.f32 %v230, %v378
    %v380 = vpop.f32.mrf.mxu0
    %v381 = vadd.f32 %v232, %v380
    %382 = vmatmul.bf16.gmra.mxu0 %v315
    %v383 = vpop.f32.mrf.mxu0
    %v384 = vadd.f32 %v235, %v383
    %v385 = vpop.f32.mrf.mxu0
    %v386 = vadd.f32 %v237, %v385
    %387 = vmatmul.bf16.gmra.mxu0 %v318
    %v388 = vpop.f32.mrf.mxu0
    %v389 = vadd.f32 %v240, %v388
    %v390 = vpop.f32.mrf.mxu0
    %v391 = vadd.f32 %v242, %v390
    %392 = vmatmul.bf16.gmra.mxu0 %v321
    %v393 = vpop.f32.mrf.mxu0
    %v394 = vadd.f32 %v245, %v393
    %v395 = vpop.f32.mrf.mxu0
    %v396 = vadd.f32 %v247, %v395
    %397 = vmatmul.bf16.gmra.mxu0 %v324
    %v398 = vpop.f32.mrf.mxu0
    %v399 = vadd.f32 %v250, %v398
    %v400 = vpop.f32.mrf.mxu0
    %v401 = vadd.f32 %v252, %v400
    %402 = vmatmul.bf16.gmra.mxu0 %v327
    %v403 = vpop.f32.mrf.mxu0
    %v404 = vadd.f32 %v255, %v403
    %v405 = vpop.f32.mrf.mxu0
    %v406 = vadd.f32 %v257, %v405
    %407 = vmatmul.bf16.gmra.mxu0 %v330
    %v408 = vpop.f32.mrf.mxu0
    %v409 = vadd.f32 %v260, %v408
    %v410 = vpop.f32.mrf.mxu0
    %v411 = vadd.f32 %v262, %v410
    %412 = vmatmul.bf16.gmra.mxu0 %v333
    %v413 = vpop.f32.mrf.mxu0
    %v414 = vadd.f32 %v265, %v413
    %v415 = vpop.f32.mrf.mxu0
    %v416 = vadd.f32 %v267, %v415
    %417 = vmatmul.bf16.gmra.mxu0 %v336
    %v418 = vpop.f32.mrf.mxu0
    %v419 = vadd.f32 %v270, %v418
    %v420 = vpop.f32.mrf.mxu0
    %v421 = vadd.f32 %v272, %v420
    %422 = vmatmul.bf16.gmra.mxu0 %v339
    %v423 = vpop.f32.mrf.mxu0
    %v424 = vadd.f32 %v275, %v423
    %v425 = vpop.f32.mrf.mxu0
    %v426 = vadd.f32 %v277, %v425
    %427 = vmatmul.bf16.gmra.mxu0 %v342
    %v428 = vpop.f32.mrf.mxu0
    %v429 = vadd.f32 %v280, %v428
    %v430 = vpop.f32.mrf.mxu0
    %v431 = vadd.f32 %v282, %v430
    %432 = vdwg.mxu0
    %v433 = vld [vmem:[%s4] sm:$0x1]
    %v435 = vperm.slane %v433, 0
    %v437 = vadd.f32 %v354, %v435
    %v438 = vadd.f32 %v356, %v435
    %v439 = vadd.f32 %v359, %v435
    %v440 = vadd.f32 %v361, %v435
    %v441 = vadd.f32 %v364, %v435
    %v442 = vadd.f32 %v366, %v435
    %v443 = vadd.f32 %v369, %v435
    %v444 = vadd.f32 %v371, %v435
    %v445 = vadd.f32 %v374, %v435
    %v446 = vadd.f32 %v376, %v435
    %v447 = vadd.f32 %v379, %v435
    %v448 = vadd.f32 %v381, %v435
    %v449 = vadd.f32 %v384, %v435
    %v450 = vadd.f32 %v386, %v435
    %v451 = vadd.f32 %v389, %v435
    %v452 = vadd.f32 %v391, %v435
    %v453 = vadd.f32 %v394, %v435
    %v454 = vadd.f32 %v396, %v435
    %v455 = vadd.f32 %v399, %v435
    %v456 = vadd.f32 %v401, %v435
    %v457 = vadd.f32 %v404, %v435
    %v458 = vadd.f32 %v406, %v435
    %v459 = vadd.f32 %v409, %v435
    %v460 = vadd.f32 %v411, %v435
    %v461 = vadd.f32 %v414, %v435
    %v462 = vadd.f32 %v416, %v435
    %v463 = vadd.f32 %v419, %v435
    %v464 = vadd.f32 %v421, %v435
    %v465 = vadd.f32 %v424, %v435
    %v466 = vadd.f32 %v426, %v435
    %v467 = vadd.f32 %v429, %v435
    %v468 = vadd.f32 %v431, %v435
    %v469 = vmax.f32 %v437, 0.0
    %v470 = vmax.f32 %v438, 0.0
    %v471 = vmax.f32 %v439, 0.0
    %v472 = vmax.f32 %v440, 0.0
    %v473 = vmax.f32 %v441, 0.0
    %v474 = vmax.f32 %v442, 0.0
    %v475 = vmax.f32 %v443, 0.0
    %v476 = vmax.f32 %v444, 0.0
    %v477 = vmax.f32 %v445, 0.0
    %v478 = vmax.f32 %v446, 0.0
    %v479 = vmax.f32 %v447, 0.0
    %v480 = vmax.f32 %v448, 0.0
    %v481 = vmax.f32 %v449, 0.0
    %v482 = vmax.f32 %v450, 0.0
    %v483 = vmax.f32 %v451, 0.0
    %v484 = vmax.f32 %v452, 0.0
    %v485 = vmax.f32 %v453, 0.0
    %v486 = vmax.f32 %v454, 0.0
    %v487 = vmax.f32 %v455, 0.0
    %v488 = vmax.f32 %v456, 0.0
    %v489 = vmax.f32 %v457, 0.0
    %v490 = vmax.f32 %v458, 0.0
    %v491 = vmax.f32 %v459, 0.0
    %v492 = vmax.f32 %v460, 0.0
    %v493 = vmax.f32 %v461, 0.0
    %v494 = vmax.f32 %v462, 0.0
    %v495 = vmax.f32 %v463, 0.0
    %v496 = vmax.f32 %v464, 0.0
    %v497 = vmax.f32 %v465, 0.0
    %v498 = vmax.f32 %v466, 0.0
    %v499 = vmax.f32 %v467, 0.0
    %v500 = vmax.f32 %v468, 0.0
    %v501 = vpack.c.bf16 %v470, %v469
    %v502 = vpack.c.bf16 %v472, %v471
    %v503 = vpack.c.bf16 %v474, %v473
    %v504 = vpack.c.bf16 %v476, %v475
    %v505 = vpack.c.bf16 %v478, %v477
    %v506 = vpack.c.bf16 %v480, %v479
    %v507 = vpack.c.bf16 %v482, %v481
    %v508 = vpack.c.bf16 %v484, %v483
    %v509 = vpack.c.bf16 %v486, %v485
    %v510 = vpack.c.bf16 %v488, %v487
    %v511 = vpack.c.bf16 %v490, %v489
    %v512 = vpack.c.bf16 %v492, %v491
    %v513 = vpack.c.bf16 %v494, %v493
    %v514 = vpack.c.bf16 %v496, %v495
    %v515 = vpack.c.bf16 %v498, %v497
    %v516 = vpack.c.bf16 %v500, %v499
    %v517 = vld [vmem:[%s5] sm:$0x1]
    %v518 = vld [vmem:[#allocation2] sm:$0x1]
    %520 = vset.pattern.permute.xlu0 0
    %521 = vperm.xlu0 %520, %v518
    %v522 = vpop.permute.xlu0 %521
    %v524 = vperm.slane %v522, 0
    %525 = vmatpush.bf16.xpose.msra.mxu0 %v508
    %526 = vmatpush.bf16.xpose.msra.mxu0 %v507
    %527 = vmatpush.bf16.xpose.msra.mxu0 %v506
    %528 = vmatpush.bf16.xpose.msra.mxu0 %v505
    %529 = vmatpush.bf16.xpose.msra.mxu0 %v504
    %530 = vmatpush.bf16.xpose.msra.mxu0 %v503
    %531 = vmatpush.bf16.xpose.msra.mxu0 %v502
    %532 = vmatpush.bf16.xpose.msra.mxu0 %v501
    %533 = vmatmul.bf16.gmra.mxu0 %v517
    %v534 = vpop.f32.mrf.mxu0
    %v535 = vadd.f32 %v524, %v534
    %v536 = vpop.f32.mrf.mxu0
    %537 = vdwg.mxu0
    %538 = vmatpush.bf16.xpose.msra.mxu0 %v516
    %539 = vmatpush.bf16.xpose.msra.mxu0 %v515
    %540 = vmatpush.bf16.xpose.msra.mxu0 %v514
    %541 = vmatpush.bf16.xpose.msra.mxu0 %v513
    %542 = vmatpush.bf16.xpose.msra.mxu0 %v512
    %543 = vmatpush.bf16.xpose.msra.mxu0 %v511
    %544 = vmatpush.bf16.xpose.msra.mxu0 %v510
    %545 = vmatpush.bf16.xpose.msra.mxu0 %v509
    %546 = vmatmul.bf16.gmra.mxu0 %v517
    %v547 = vpop.f32.mrf.mxu0
    %v548 = vadd.f32 %v524, %v547
    %v549 = vpop.f32.mrf.mxu0
    %550 = vdwg.mxu0
    %v553 = vrot.slane %v548, 7
    %vm554 = vcmask 1040384
    %v555 = vsel %vm554, %v535, %v553
    %v557 = vlaneseq
    %vm558 = vcmp.ge.s32.totalorder %v557, 0
    %vm559 = vcmp.lt.s32.totalorder %v557, 256
    %vm560 = vmand %vm558, %vm559
    %561 = vst.msk [vmem:[#allocation3] sm:$0x3] %vm560, %v555
    // Predicated region
    $region30: #{tpu_custom_call.1} parent=1 // pred_check
      _
    $region31: #{tpu_custom_call.1} parent=1 // pred_check_branch
      %563 = sbr.rel (0) target = $region33
    $region32: #{tpu_custom_call.1} parent=1 // pred_region
      %565 = vsyncadd [#allocation4], 0
      %s567 = sshll.u32 [#allocation3], 4
      %s568 = int_to_ptr.vmem [resolvable:$true] %s567
      %s569 = sshll.u32 %s7, 4
      %s570 = int_to_ptr.hbm [resolvable:$true] %s569
      %572 = dma.vmem_to_hbm [thread:$0]  %s568, 32, %s570, [#allocation4]
    $region33: #{tpu_custom_call.1} parent=1 // pred_fallthru
      _
    // Predicated region
    $region34: #{tpu_custom_call.1} parent=1 // pred_check
      _
    $region35: #{tpu_custom_call.1} parent=1 // pred_check_branch
      %574 = sbr.rel (0) target = $region37
    $region36: #{tpu_custom_call.1} parent=1 // pred_region
      %576 = dma.done [#allocation4], 32
    $region37: #{tpu_custom_call.1} parent=1 // pred_fallthru
      _
    %577 = vsyncpa [#allocation4], 1

</llo_original>
